<compile_context>
chip_gen: v7x
topology: tpu7x:2x2x1
jax: 0.10.0
libtpu: 0.0.40
codegen_flags: <defaults>
</compile_context>

<pallas_src>
import jax
import jax.numpy as jnp
from jax import lax
from jax.experimental import pallas as pl
from jax.experimental.pallas import tpu as pltpu


def _round_up(n, m):
    return ((n + m - 1) // m) * m


def _cdiv(a, b):
    return (a + b - 1) // b


def _make_kernel(*, tn, tiles_per_core, B, mx_dtype, use_acc_scratch):
    """Builds the fused gate + scatter-sum kernel for fixed tile geometry."""

    def kernel(idx_ref, x_ref, ref_ref, w_ref, b_ref, o_ref, iota_ref, *maybe_acc):
        acc_ref = maybe_acc[0] if use_acc_scratch else o_ref
        i = pl.program_id(1)                       # N-tile index within this core

        @pl.when(i == 0)
        def _():
            # Grid-invariant segment-id iota: built once per core, reused each step.
            iota_ref[...] = lax.broadcasted_iota(jnp.int32, (B, tn), 0)
            acc_ref[...] = jnp.zeros_like(acc_ref)

        x = x_ref[...]                             # (tn, F), input dtype
        r = ref_ref[...]                           # (tn, F)
        w = w_ref[...]                             # (2, F): row 0 = wx, row 1 = wr

        # Per-row gate: w[n] = tanh(sum_f x[n,f]*wx[f] + ref[n,f]*wr[f] + b)
        # (== tanh(Linear(cat([x, ref], -1)))).  One fused lane reduction, f32 acc.
        prod = x * w[0:1, :] + r * w[1:2, :]
        pre = jnp.sum(prod, axis=-1, keepdims=True, dtype=jnp.float32) + b_ref[0]
        gate = jnp.tanh(pre)                       # (tn, 1) f32 (EUP)

        if x.dtype == jnp.float32:
            gated = (gate * x).astype(mx_dtype)    # exact f32 scale, then MXU dtype
        else:
            gated = (gate.astype(x.dtype) * x).astype(mx_dtype)

        # Transposed one-hot, lane-dense along n: onehot_T[b, n] = (index[n] == b).
        # Out-of-range segment ids (row padding) match nothing -> contribute zero.
        t = pl.program_id(0) * tiles_per_core + i
        idx = idx_ref[pl.ds(t, 1), :]                          # (1, tn) int32
        onehot_t = (iota_ref[...] == idx).astype(mx_dtype)     # (B, tn)

        prec = lax.Precision.HIGHEST if mx_dtype == jnp.float32 else lax.Precision.DEFAULT
        # acc[b, f] += sum_n onehot_T[b, n] * gated[n, f]   (MXU, f32 accumulate)
        acc_ref[...] += jnp.dot(onehot_t, gated,
                                preferred_element_type=jnp.float32,
                                precision=prec)

        if use_acc_scratch:
            @pl.when(i == pl.num_programs(1) - 1)
            def _():
                o_ref[...] = acc_ref[...].astype(o_ref.dtype)

    return kernel


def gate_scatter_sum(x, ref, weight, bias, index, batch_size, *,
                     tn=None, core_split=1, scatter_mxu_bf16=False):
    """out[b] = sum_{n: index[n]==b} tanh([x_n, ref_n] @ weight^T + bias) * x_n."""
    N, F = x.shape
    assert ref.shape == (N, F)
    weight = jnp.asarray(weight)
    assert weight.shape == (1, 2 * F)
    assert batch_size >= 1 and N >= 1

    in_dtype = x.dtype
    out_dtype = x.dtype
    in_item = jnp.dtype(in_dtype).itemsize
    out_item = jnp.dtype(out_dtype).itemsize
    out_is_f32 = out_dtype == jnp.float32

    # Lane-dense feature axis, sublane-aligned segment axis (padding sliced off).
    F_pad = _round_up(F, 128)
    B_pad = _round_up(batch_size, 8)

    # ---- VMEM budget -> tile size (generation aware: v7x has only 64 MiB). ----
    try:
        cap = int(getattr(pltpu.get_tpu_info(), "vmem_capacity_bytes", 64 << 20))
    except Exception:
        cap = 64 << 20                              # conservative (v7x) fallback
    vmem_limit = min(int(cap * 0.9), 120 << 20)
    budget = int(vmem_limit * 0.75)

    fixed = B_pad * F_pad * out_item                # resident output block
    if not out_is_f32:
        fixed += B_pad * F_pad * 4                  # f32 accumulator scratch
    fixed += 8 * F_pad * in_item                    # resident (2, F) weights (sublane-padded)
    fixed += 8 * _round_up(N, 128) * 4              # resident index block (approx)
    per_row = 2 * 2 * F_pad * in_item + 4 * B_pad   # x/ref double-buffered + iota column
    avail = budget - fixed
    tn_cap = tn if tn is not None else 512
    tn_budget = 128 if avail < per_row * 128 else (avail // per_row) // 128 * 128
    tn_budget = int(max(128, min(tn_budget, max(128, tn_cap))))

    # ---- Grid layout: (core_split "parallel", N-tiles "arbitrary"). ----
    if _cdiv(N, tn_budget) <= 1:
        tn_eff = max(8, _round_up(N, 8))
        cs, tiles_per_core = 1, 1
    else:
        tn_eff = tn_budget                          # multiple of 128
        n_tiles = _cdiv(N, tn_eff)
        cs = max(1, min(core_split, n_tiles))
        tiles_per_core = _cdiv(n_tiles, cs)
    n_tiles_total = cs * tiles_per_core
    n_pad = n_tiles_total * tn_eff

    # ---- Pad inputs (zero rows contribute nothing; pad segment id is out-of-range). ----
    pad_rows, pad_cols = n_pad - N, F_pad - F
    if pad_rows or pad_cols:
        x = jnp.pad(x, ((0, pad_rows), (0, pad_cols)))
        ref = jnp.pad(ref, ((0, pad_rows), (0, pad_cols)))
    index = index.astype(jnp.int32)
    if pad_rows:
        index = jnp.pad(index, (0, pad_rows), constant_values=B_pad)
    idx2d = index.reshape(n_tiles_total, tn_eff)

    # Split Linear weight into wx | wr, pad features, keep it in the input dtype.
    w2 = jnp.concatenate([weight[:, :F], weight[:, F:]], axis=0)   # (2, F)
    if pad_cols:
        w2 = jnp.pad(w2, ((0, 0), (0, pad_cols)))
    w2 = w2.astype(in_dtype)
    b = jnp.asarray(bias, jnp.float32).reshape(1)

    mx_dtype = jnp.bfloat16 if (in_dtype == jnp.bfloat16 or scatter_mxu_bf16) else jnp.float32

    kernel = _make_kernel(tn=tn_eff, tiles_per_core=tiles_per_core, B=B_pad,
                          mx_dtype=mx_dtype, use_acc_scratch=not out_is_f32)

    scratch_shapes = [pltpu.VMEM((B_pad, tn_eff), jnp.int32)]      # hoisted iota
    if not out_is_f32:
        scratch_shapes.append(pltpu.VMEM((B_pad, F_pad), jnp.float32))

    out = pl.pallas_call(
        kernel,
        out_shape=jax.ShapeDtypeStruct((cs, B_pad, F_pad), out_dtype),
        grid_spec=pltpu.PrefetchScalarGridSpec(
            num_scalar_prefetch=0,
            grid=(cs, tiles_per_core),
            in_specs=[
                # resident (no per-step DMA): index tiles, weights; bias in SMEM
                pl.BlockSpec((n_tiles_total, tn_eff), lambda c, i: (0, 0)),
                pl.BlockSpec((tn_eff, F_pad), lambda c, i: (c * tiles_per_core + i, 0)),
                pl.BlockSpec((tn_eff, F_pad), lambda c, i: (c * tiles_per_core + i, 0)),
                pl.BlockSpec((2, F_pad), lambda c, i: (0, 0)),
                pl.BlockSpec((1,), lambda c, i: (0,),
                             memory_space=pltpu.MemorySpace.SMEM),
            ],
            out_specs=pl.BlockSpec((None, B_pad, F_pad), lambda c, i: (c, 0, 0)),
            scratch_shapes=scratch_shapes,
        ),
        compiler_params=pltpu.CompilerParams(
            dimension_semantics=("parallel", "arbitrary"),   # N is the reduction axis
            vmem_limit_bytes=vmem_limit,
        ),
    )(idx2d, x, ref, w2, b)

    out = out[0] if cs == 1 else jnp.sum(out, axis=0)        # combine per-core partials
    return out[:batch_size, :F]


class Gate:
    """JAX/Pallas port of the PyTorch `Gate` module (Linear(in_size, 1) + tanh gate)."""

    def __init__(self, in_size, *, key=None, dtype=jnp.float32):
        if key is None:
            key = jax.random.PRNGKey(0)
        kw, kb = jax.random.split(key)
        bound = 1.0 / (in_size ** 0.5)
        self.weight = jax.random.uniform(kw, (1, in_size), dtype, -bound, bound)
        self.bias = jax.random.uniform(kb, (1,), dtype, -bound, bound)

    def __call__(self, x, ref, index, batch_size, dim=0, *, core_split=1):
        assert dim == 0, "only dim=0 (as used by the module) is supported"
        return gate_scatter_sum(x, ref, self.weight, self.bias, index, batch_size,
                                core_split=core_split)


if __name__ == "__main__":
    key = jax.random.PRNGKey(0)
    kx, kr, ki, kp = jax.random.split(key, 4)

    # Small shapes implied by the forward: N elements, hidden F per input,
    # in_size = 2F for the concatenated gate, batch_size B output rows.
    N, F, B = 20, 32, 4
    x = jax.random.normal(kx, (N, F), dtype=jnp.float32)
    ref = jax.random.normal(kr, (N, F), dtype=jnp.float32)
    index = jax.random.randint(ki, (N,), 0, B, dtype=jnp.int32)

    model = Gate(in_size=2 * F, key=kp)
    out = jax.block_until_ready(model(x, ref, index, batch_size=B, dim=0))

    # Plain-JAX reference.
    cat = jnp.concatenate([x, ref], axis=-1)
    w = jnp.tanh(cat @ model.weight.T + model.bias)                    # (N, 1)
    expected = jax.ops.segment_sum(w * x, index, num_segments=B)
    assert out.shape == (B, F)
    assert jnp.allclose(out, expected, atol=1e-4, rtol=1e-4), "mismatch (single tile)"

    # Exercise the padded, multi-tile path (tn=128, N not a multiple of it).
    N2 = 300
    kx2, kr2, ki2 = jax.random.split(kp, 3)
    x2 = jax.random.normal(kx2, (N2, F), dtype=jnp.float32)
    ref2 = jax.random.normal(kr2, (N2, F), dtype=jnp.float32)
    index2 = jax.random.randint(ki2, (N2,), 0, B, dtype=jnp.int32)
    cat2 = jnp.concatenate([x2, ref2], axis=-1)
    w2 = jnp.tanh(cat2 @ model.weight.T + model.bias)
    expected2 = jax.ops.segment_sum(w2 * x2, index2, num_segments=B)

    out2 = jax.block_until_ready(
        gate_scatter_sum(x2, ref2, model.weight, model.bias, index2, B, tn=128))
    assert jnp.allclose(out2, expected2, atol=1e-4, rtol=1e-4), "mismatch (multi tile)"

    # Exercise the core-split (v7x megacore) partial-accumulator path; correct on any chip.
    out3 = jax.block_until_ready(
        gate_scatter_sum(x2, ref2, model.weight, model.bias, index2, B,
                         tn=128, core_split=2))
    assert jnp.allclose(out3, expected2, atol=1e-4, rtol=1e-4), "mismatch (core split)"

    print("KERNEL_OK")
</pallas_src>

<mosaic_0001>
module attributes {stable_mosaic.version = 11 : i64} {
  func.func @kernel(%arg0: i32, %arg1: i32, %arg2: memref<1x24xi32, #tpu.memory_space<vmem>>, %arg3: memref<24x128xf32, #tpu.memory_space<vmem>>, %arg4: memref<24x128xf32, #tpu.memory_space<vmem>>, %arg5: memref<2x128xf32, #tpu.memory_space<vmem>>, %arg6: memref<1xf32, #tpu.memory_space<smem>>, %arg7: memref<1x8x128xf32, #tpu.memory_space<vmem>>, %arg8: memref<8x24xi32, #tpu.memory_space<vmem>>) attributes {dimension_semantics = [#tpu.dimension_semantics<parallel>, #tpu.dimension_semantics<arbitrary>], iteration_bounds = array<i64: 1, 1>, scalar_prefetch = 0 : i64, scratch_operands = 1 : i64, tpu.core_type = #tpu.core_type<tc>, window_params = [{pipeline_mode = #tpu.pipeline_mode<synchronous>, transform_indices = @transform_0, window_bounds = array<i64: 1, 24>}, {transform_indices = @transform_1, window_bounds = array<i64: 24, 128>}, {transform_indices = @transform_2, window_bounds = array<i64: 24, 128>}, {pipeline_mode = #tpu.pipeline_mode<synchronous>, transform_indices = @transform_3, window_bounds = array<i64: 2, 128>}, {transform_indices = @transform_4, window_bounds = array<i64: 1>}, {transform_indices = @transform_5, window_bounds = array<i64: 1, 8, 128>}]} {
    %c0_i32 = arith.constant 0 : i32
    %0 = arith.cmpi eq, %arg1, %c0_i32 : i32
    %1 = arith.extui %0 : i1 to i32
    %c0_i32_0 = arith.constant 0 : i32
    %2 = arith.cmpi ne, %1, %c0_i32_0 : i32
    scf.if %2 {
      %37 = tpu.iota {dimensions = array<i32: 0>} : vector<8x24xi32>
      %c0_17 = arith.constant 0 : index
      %c0_18 = arith.constant 0 : index
      %38 = vector.load %arg8[%c0_17, %c0_18] : memref<8x24xi32, #tpu.memory_space<vmem>>, vector<8x24xi32>
      tpu.vector_store %arg8[%c0_17, %c0_18], %37 {strides = array<i32>} : memref<8x24xi32, #tpu.memory_space<vmem>>, vector<8x24xi32>,
      %cst_19 = arith.constant 0.000000e+00 : f32
      %39 = vector.broadcast %cst_19 : f32 to vector<8x128xf32>
      %c0_20 = arith.constant 0 : index
      %c0_21 = arith.constant 0 : index
      %c0_22 = arith.constant 0 : index
      %40 = vector.load %arg7[%c0_20, %c0_21, %c0_22] : memref<1x8x128xf32, #tpu.memory_space<vmem>>, vector<1x8x128xf32>
      %41 = vector.shape_cast %40 : vector<1x8x128xf32> to vector<8x128xf32>
      %42 = vector.shape_cast %39 : vector<8x128xf32> to vector<1x8x128xf32>
      tpu.vector_store %arg7[%c0_20, %c0_21, %c0_22], %42 {strides = array<i32>} : memref<1x8x128xf32, #tpu.memory_space<vmem>>, vector<1x8x128xf32>,
    } else {
    }
    %c0 = arith.constant 0 : index
    %c0_1 = arith.constant 0 : index
    %3 = vector.load %arg3[%c0, %c0_1] : memref<24x128xf32, #tpu.memory_space<vmem>>, vector<24x128xf32>
    %c0_2 = arith.constant 0 : index
    %c0_3 = arith.constant 0 : index
    %4 = vector.load %arg4[%c0_2, %c0_3] : memref<24x128xf32, #tpu.memory_space<vmem>>, vector<24x128xf32>
    %c0_4 = arith.constant 0 : index
    %c0_5 = arith.constant 0 : index
    %5 = vector.load %arg5[%c0_4, %c0_5] : memref<2x128xf32, #tpu.memory_space<vmem>>, vector<2x128xf32>
    %6 = vector.extract_strided_slice %5 {offsets = [0, 0], sizes = [1, 128], strides = [1, 1]} : vector<2x128xf32> to vector<1x128xf32>
    %7 = vector.broadcast %6 : vector<1x128xf32> to vector<24x128xf32>
    %8 = arith.mulf %3, %7 : vector<24x128xf32>
    %9 = vector.extract_strided_slice %5 {offsets = [1, 0], sizes = [1, 128], strides = [1, 1]} : vector<2x128xf32> to vector<1x128xf32>
    %10 = vector.broadcast %9 : vector<1x128xf32> to vector<24x128xf32>
    %11 = arith.mulf %4, %10 : vector<24x128xf32>
    %12 = arith.addf %8, %11 : vector<24x128xf32>
    %cst = arith.constant dense<0.000000e+00> : vector<24xf32>
    %13 = vector.multi_reduction <add>, %12, %cst [1] : vector<24x128xf32> to vector<24xf32>
    %14 = vector.shape_cast %13 : vector<24xf32> to vector<24x1xf32>
    %c0_6 = arith.constant 0 : index
    %15 = memref.load %arg6[%c0_6] : memref<1xf32, #tpu.memory_space<smem>>
    %16 = vector.broadcast %15 : f32 to vector<24x1xf32>
    %17 = arith.addf %14, %16 : vector<24x1xf32>
    %18 = math.tanh %17 : vector<24x1xf32>
    %19 = vector.broadcast %18 : vector<24x1xf32> to vector<24x128xf32>
    %20 = arith.mulf %19, %3 : vector<24x128xf32>
    %c1_i32 = arith.constant 1 : i32
    %21 = arith.muli %arg0, %c1_i32 : i32
    %22 = arith.addi %21, %arg1 : i32
    %23 = arith.index_cast %22 : i32 to index
    %c0_7 = arith.constant 0 : index
    %24 = vector.load %arg2[%23, %c0_7] : memref<1x24xi32, #tpu.memory_space<vmem>>, vector<1x24xi32>
    %c0_8 = arith.constant 0 : index
    %c0_9 = arith.constant 0 : index
    %25 = vector.load %arg8[%c0_8, %c0_9] : memref<8x24xi32, #tpu.memory_space<vmem>>, vector<8x24xi32>
    %26 = vector.broadcast %24 : vector<1x24xi32> to vector<8x24xi32>
    %27 = arith.cmpi eq, %25, %26 : vector<8x24xi32>
    %28 = arith.extui %27 : vector<8x24xi1> to vector<8x24xi32>
    %29 = arith.sitofp %28 : vector<8x24xi32> to vector<8x24xf32>
    %c0_10 = arith.constant 0 : index
    %c0_11 = arith.constant 0 : index
    %c0_12 = arith.constant 0 : index
    %30 = vector.load %arg7[%c0_10, %c0_11, %c0_12] : memref<1x8x128xf32, #tpu.memory_space<vmem>>, vector<1x8x128xf32>
    %31 = vector.shape_cast %30 : vector<1x8x128xf32> to vector<8x128xf32>
    %cst_13 = arith.constant dense<0.000000e+00> : vector<8x128xf32>
    %32 = tpu.matmul %29, %20, %cst_13 {dimension_numbers = #tpu.dot_dimension_numbers<[1], [0], [0], [1], [0, 0, 1, 1], [], []>, precision = #tpu.contract_precision<fp32>} : vector<8x24xf32>, vector<24x128xf32>, vector<8x128xf32> -> vector<8x128xf32>
    %33 = arith.addf %31, %32 : vector<8x128xf32>
    %c0_14 = arith.constant 0 : index
    %c0_15 = arith.constant 0 : index
    %c0_16 = arith.constant 0 : index
    %34 = vector.load %arg7[%c0_14, %c0_15, %c0_16] : memref<1x8x128xf32, #tpu.memory_space<vmem>>, vector<1x8x128xf32>
    %35 = vector.shape_cast %34 : vector<1x8x128xf32> to vector<8x128xf32>
    %36 = vector.shape_cast %33 : vector<8x128xf32> to vector<1x8x128xf32>
    tpu.vector_store %arg7[%c0_14, %c0_15, %c0_16], %36 {strides = array<i32>} : memref<1x8x128xf32, #tpu.memory_space<vmem>>, vector<1x8x128xf32>,
    return
  }
  func.func @transform_0(%arg0: i32, %arg1: i32) -> (i32, i32) {
    %c0_i32 = arith.constant 0 : i32
    %c0_i32_0 = arith.constant 0 : i32
    %c0_i32_1 = arith.constant 0 : i32
    return %c0_i32, %c0_i32_0 : i32, i32
  }
  func.func @transform_1(%arg0: i32, %arg1: i32) -> (i32, i32) {
    %c1_i32 = arith.constant 1 : i32
    %0 = arith.muli %arg0, %c1_i32 : i32
    %1 = arith.addi %0, %arg1 : i32
    %c0_i32 = arith.constant 0 : i32
    %c0_i32_0 = arith.constant 0 : i32
    return %1, %c0_i32 : i32, i32
  }
  func.func @transform_2(%arg0: i32, %arg1: i32) -> (i32, i32) {
    %c1_i32 = arith.constant 1 : i32
    %0 = arith.muli %arg0, %c1_i32 : i32
    %1 = arith.addi %0, %arg1 : i32
    %c0_i32 = arith.constant 0 : i32
    %c0_i32_0 = arith.constant 0 : i32
    return %1, %c0_i32 : i32, i32
  }
  func.func @transform_3(%arg0: i32, %arg1: i32) -> (i32, i32) {
    %c0_i32 = arith.constant 0 : i32
    %c0_i32_0 = arith.constant 0 : i32
    %c0_i32_1 = arith.constant 0 : i32
    return %c0_i32, %c0_i32_0 : i32, i32
  }
  func.func @transform_4(%arg0: i32, %arg1: i32) -> i32 {
    %c0_i32 = arith.constant 0 : i32
    %c0_i32_0 = arith.constant 0 : i32
    return %c0_i32 : i32
  }
  func.func @transform_5(%arg0: i32, %arg1: i32) -> (i32, i32, i32) {
    %c0_i32 = arith.constant 0 : i32
    %c0_i32_0 = arith.constant 0 : i32
    %c0_i32_1 = arith.constant 0 : i32
    return %arg0, %c0_i32, %c0_i32_0 : i32, i32, i32
  }
}

</mosaic_0001>

<llo_original>
// kernel: tpu_custom_call.1
$region0: #{tpu_custom_call.1}
  #allocation0 [shape = 'u32[]', space=smem, size = 0x4, offset = 0x4, fixed_abs, tag = 'smem constant byte address 0x4 - core index']
  #allocation1 [shape = 'u32[144,128]{1,0:T(1,128)}', space=vmem, size = 0x12000, scoped, tag = 'internal scratch']
  #allocation2 [shape = 's32[8,24]{1,0:T(8,128)}', space=vmem, size = 0x1000, scoped, tag = 'scratch operand']
  #allocation3 [shape = 'f32[1]{0:T(128)S(6)}', space=smem, size = 0x200, scoped, tag = 'scoped memory for tpu_custom_call.1']
  %s0 = inlined_call_operand.vmem [shape: s32[1,24], index: 0, kind: input, shape index: {}]
  %s1 = inlined_call_operand.hbm [shape: f32[24,128], index: 1, kind: input, shape index: {}]
  %s2 = inlined_call_operand.hbm [shape: f32[24,128], index: 2, kind: input, shape index: {}]
  %s3 = inlined_call_operand.vmem [shape: f32[2,128], index: 3, kind: input, shape index: {}]
  %s4 = inlined_call_operand.<no memory space> [shape: f32[1], index: 4, kind: input, shape index: {}]
  %s5 = inlined_call_operand.hbm [shape: f32[1,8,128], index: 5, kind: output, shape index: {}]
  %s6 = sld [smem:[#allocation0]]
  $region42: #{tpu_custom_call.1} parent=0
    _
  %s8 = ssub.s32 1, %s6
  %s9 = scalar_select 0, %s8, %s6
  %10 = sst [smem:[#allocation3]] %s4
  $region1: #{tpu_custom_call.1} parent=0
    #allocation4 [shape = 'u8[12288]{0}', space=vmem, size = 0x3000, scoped, tag = 'input window, operand 1, single buffered']
    #allocation5 [shape = 's32[1]{0}', space=sflag, size = 0x4, scoped, tag = 'scoped memory for tpu_custom_call.1']
    #allocation6 [shape = 's32[1]{0}', space=sflag, size = 0x4, scoped, tag = 'scoped memory for tpu_custom_call.1']
    #allocation7 [shape = 'u8[12288]{0}', space=vmem, size = 0x3000, scoped, tag = 'input window, operand 2, single buffered']
    #allocation8 [shape = 's32[1]{0}', space=sflag, size = 0x4, scoped, tag = 'scoped memory for tpu_custom_call.1']
    #allocation9 [shape = 'u8[4096]{0}', space=vmem, size = 0x1000, scoped, tag = 'output window, operand 0, single buffered']
    %11 = vsyncpa [#allocation5], 0
    %12 = vsyncpa [#allocation8], 0
    %13 = vsyncpa [#allocation6], 0
    // Predicated region
    $region2: #{tpu_custom_call.1} parent=1 // pred_check
      _
    $region3: #{tpu_custom_call.1} parent=1 // pred_check_branch
      %15 = sbr.rel (0) target = $region5
    $region4: #{tpu_custom_call.1} parent=1 // pred_region
      _
    $region5: #{tpu_custom_call.1} parent=1 // pred_fallthru
      _
    // Predicated region
    $region6: #{tpu_custom_call.1} parent=1 // pred_check
      _
    $region7: #{tpu_custom_call.1} parent=1 // pred_check_branch
      %17 = sbr.rel (0) target = $region9
    $region8: #{tpu_custom_call.1} parent=1 // pred_region
      %s18 = sadd.s32 0, 0
      %s19 = smul.u32 3, %s18
      %s21 = ssub.s32 384, 384
      %22 = vsyncadd [#allocation5], %s21
      %s23 = smul.addr %s19, 128
      %s24 = scalar_lea.hbm %s1, %s23
      %s25 = sshll.u32 [#allocation4], 4
      %s26 = int_to_ptr.vmem [resolvable:$true] %s25
      %31 = dma.hbm_to_vmem [thread:$0]  %s24, 384, %s26, [#allocation5], 128, 128, 8
    $region9: #{tpu_custom_call.1} parent=1 // pred_fallthru
      _
    // Predicated region
    $region10: #{tpu_custom_call.1} parent=1 // pred_check
      _
    $region11: #{tpu_custom_call.1} parent=1 // pred_check_branch
      %33 = sbr.rel (0) target = $region13
    $region12: #{tpu_custom_call.1} parent=1 // pred_region
      %s34 = sadd.s32 0, 0
      %s35 = smul.u32 3, %s34
      %s37 = ssub.s32 384, 384
      %38 = vsyncadd [#allocation8], %s37
      %s39 = smul.addr %s35, 128
      %s40 = scalar_lea.hbm %s2, %s39
      %s41 = sshll.u32 [#allocation7], 4
      %s42 = int_to_ptr.vmem [resolvable:$true] %s41
      %47 = dma.hbm_to_vmem [thread:$0]  %s40, 384, %s42, [#allocation8], 128, 128, 8
    $region13: #{tpu_custom_call.1} parent=1 // pred_fallthru
      _
    // Predicated region
    $region14: #{tpu_custom_call.1} parent=1 // pred_check
      _
    $region15: #{tpu_custom_call.1} parent=1 // pred_check_branch
      %49 = sbr.rel (0) target = $region17
    $region16: #{tpu_custom_call.1} parent=1 // pred_region
      _
    $region17: #{tpu_custom_call.1} parent=1 // pred_fallthru
      _
    // Predicated region
    $region18: #{tpu_custom_call.1} parent=1 // pred_check
      _
    $region19: #{tpu_custom_call.1} parent=1 // pred_check_branch
      %51 = sbr.rel (0) target = $region21
    $region20: #{tpu_custom_call.1} parent=1 // pred_region
      _
    $region21: #{tpu_custom_call.1} parent=1 // pred_fallthru
      _
    // Predicated region
    $region22: #{tpu_custom_call.1} parent=1 // pred_check
      _
    $region23: #{tpu_custom_call.1} parent=1 // pred_check_branch
      %53 = sbr.rel (0) target = $region25
    $region24: #{tpu_custom_call.1} parent=1 // pred_region
      %54 = dma.done [#allocation5], 384
    $region25: #{tpu_custom_call.1} parent=1 // pred_fallthru
      _
    // Predicated region
    $region26: #{tpu_custom_call.1} parent=1 // pred_check
      _
    $region27: #{tpu_custom_call.1} parent=1 // pred_check_branch
      %56 = sbr.rel (0) target = $region29
    $region28: #{tpu_custom_call.1} parent=1 // pred_region
      %57 = dma.done [#allocation8], 384
    $region29: #{tpu_custom_call.1} parent=1 // pred_fallthru
      _
    %s58 = sadd.s32 0, 0
    %s59 = smul.u32 3, %s58
    %s60 = sadd.s32 0, 0
    %s61 = smul.u32 3, %s60
    %p62 = scmp.eq.s32.totalorder 0, 0
    // Predicated region
    $region30: #{tpu_custom_call.1} parent=1 // pred_check
      %p63 = pneg %p62
    $region31: #{tpu_custom_call.1} parent=1 // pred_check_branch
      %65 = sbr.rel (%p63) target = $region33
    $region32: #{tpu_custom_call.1} parent=1 // pred_region
      %v66 = vlaneseq
      %v67 = vshrl.u32 %v66, 7
      %vm68 = vcmask 195584
      %69 = vst.msk [vmem:[#allocation2] sm:$0xff] %vm68, %v67
      %70 = vst [vmem:[#allocation9] sm:$0xff] 0.0
    $region33: #{tpu_custom_call.1} parent=1 // pred_fallthru
      _
    %v71 = vld [vmem:[#allocation4] sm:$0xff]
    %v72 = vld [vmem:[#allocation4 + $0x8] sm:$0xff]
    %v73 = vld [vmem:[#allocation4 + $0x10] sm:$0xff]
    %v74 = vld [vmem:[#allocation7] sm:$0xff]
    %v75 = vld [vmem:[#allocation7 + $0x8] sm:$0xff]
    %v76 = vld [vmem:[#allocation7 + $0x10] sm:$0xff]
    %v77 = vld [vmem:[%s3] sm:$0x3]
    %v78 = vlaneseq
    %v79 = vshrl.u32 %v78, 7
    %v80 = vsub.s32 0, %v79
    %v81 = vrot.slane %v77, %v80
    %v82 = vmul.f32 %v71, %v81
    %v83 = vmul.f32 %v72, %v81
    %v84 = vmul.f32 %v73, %v81
    %v85 = vlaneseq
    %v86 = vshrl.u32 %v85, 7
    %v87 = vsub.s32 1, %v86
    %v88 = vrot.slane %v77, %v87
    %v89 = vmul.f32 %v74, %v88
    %v90 = vmul.f32 %v75, %v88
    %v91 = vmul.f32 %v76, %v88
    %v92 = vadd.f32 %v82, %v89
    %v93 = vadd.f32 %v83, %v90
    %v94 = vadd.f32 %v84, %v91
    %95 = vadd.xlane.f32.xlu0 %v92
    %v96 = vpop.xlane.xlu0 %95
    %97 = vadd.xlane.f32.xlu0 %v93
    %v98 = vpop.xlane.xlu0 %97
    %99 = vadd.xlane.f32.xlu0 %v94
    %v100 = vpop.xlane.xlu0 %99
    %s101 = sld [smem:[#allocation3]]
    %v102 = vstv %s101
    %v103 = vadd.f32 %v96, %v102
    %v104 = vadd.f32 %v98, %v102
    %v105 = vadd.f32 %v100, %v102
    %v106 = vtanh.pop %v103
    %v107 = vtanh.pop %v104
    %v108 = vtanh.pop %v105
    %v109 = vmul.f32 %v106, %v71
    %v110 = vmul.f32 %v107, %v72
    %v111 = vmul.f32 %v108, %v73
    %s112 = sadd.s32 0, 0
    %s113 = scalar_lea.vmem %s0, %s112
    %v114 = vld [vmem:[%s113] sm:$0x1]
    %v115 = vld [vmem:[#allocation2] sm:$0xff]
    %v116 = vlaneseq
    %v117 = vshrl.u32 %v116, 7
    %v118 = vsub.s32 0, %v117
    %v119 = vrot.slane %v114, %v118
    %vm120 = vcmp.eq.s32.totalorder %v115, %v119
    %v121 = vsel %vm120, 1, 0
    %v122 = vcvt.s32.f32 %v121
    %v123 = vld [vmem:[#allocation9] sm:$0xff]
    %vm124 = vcmask 195584
    %v126 = vsel %vm124, %v122, 0
    %128 = vmatprep.subr.mxu0 0.0
    %v129 = vand.u32 %v109, 4294901760
    %130 = vmatpush1.msra.mxu0 %v129
    %131 = vmatprep.subr.mxu0 0.0
    %v132 = vand.u32 %v110, 4294901760
    %133 = vmatpush1.msra.mxu0 %v132
    %134 = vmatprep.subr.mxu0 0.0
    %v135 = vand.u32 %v111, 4294901760
    %136 = vmatpush1.msra.mxu0 %v135
    %137 = vmatprep.subr.mxu0 0.0
    %138 = vmatpush1.msra.mxu0 0.0
    %139 = vmatprep.subr.mxu0 0.0
    %140 = vmatpush1.msra.mxu0 0.0
    %141 = vmatprep.subr.mxu0 0.0
    %142 = vmatpush1.msra.mxu0 0.0
    %143 = vmatprep.subr.mxu0 0.0
    %144 = vmatpush1.msra.mxu0 0.0
    %145 = vmatprep.subr.mxu0 0.0
    %146 = vmatpush1.msra.mxu0 0.0
    %147 = vmatprep.subr.mxu0 0.0
    %148 = vmatpush1.msra.mxu0 0.0
    %149 = vmatprep.subr.mxu0 0.0
    %150 = vmatpush1.msra.mxu0 0.0
    %151 = vmatprep.subr.mxu0 0.0
    %152 = vmatpush1.msra.mxu0 0.0
    %153 = vmatprep.subr.mxu0 0.0
    %154 = vmatpush1.msra.mxu0 0.0
    %155 = vmatprep.subr.mxu0 0.0
    %156 = vmatpush1.msra.mxu0 0.0
    %157 = vmatprep.subr.mxu0 0.0
    %158 = vmatpush1.msra.mxu0 0.0
    %159 = vmatprep.subr.mxu0 0.0
    %160 = vmatpush1.msra.mxu0 0.0
    %161 = vmatprep.subr.mxu0 0.0
    %162 = vmatpush1.msra.mxu0 0.0
    %163 = vmatprep.subr.mxu0 0.0
    %164 = vmatpush1.msra.mxu0 0.0
    %165 = vmatprep.subr.mxu0 0.0
    %166 = vmatpush1.msra.mxu0 0.0
    %167 = vmatprep.subr.mxu0 0.0
    %168 = vmatpush1.msra.mxu0 0.0
    %169 = vmatprep.subr.mxu0 0.0
    %170 = vmatpush1.msra.mxu0 0.0
    %171 = vmatprep.subr.mxu0 0.0
    %172 = vmatpush1.msra.mxu0 0.0
    %173 = vmatprep.subr.mxu0 0.0
    %174 = vmatpush1.msra.mxu0 0.0
    %175 = vmatprep.subr.mxu0 0.0
    %176 = vmatpush1.msra.mxu0 0.0
    %177 = vmatprep.subr.mxu0 0.0
    %178 = vmatpush1.msra.mxu0 0.0
    %179 = vmatprep.subr.mxu0 0.0
    %180 = vmatpush1.msra.mxu0 0.0
    %181 = vmatprep.subr.mxu0 0.0
    %182 = vmatpush1.msra.mxu0 0.0
    %183 = vmatprep.subr.mxu0 0.0
    %184 = vmatpush1.msra.mxu0 0.0
    %185 = vmatprep.subr.mxu0 0.0
    %186 = vmatpush1.msra.mxu0 0.0
    %187 = vmatprep.subr.mxu0 0.0
    %188 = vmatpush1.msra.mxu0 0.0
    %189 = vmatprep.subr.mxu0 0.0
    %190 = vmatpush1.msra.mxu0 0.0
    %191 = vmatprep.subr.mxu0 0.0
    %192 = vmatpush1.msra.mxu0 0.0
    %193 = vmatprep.subr.mxu0 0.0
    %194 = vmatpush1.msra.mxu0 0.0
    %195 = vmatprep.mubr.f32.mxu0 0.0
    %v196 = vand.u32 %v126, 4294901760
    %v197 = vsub.f32 %v126, %v196
    %v198 = vand.u32 %v197, 4294901760
    %v199 = vsub.f32 %v197, %v198
    %v200 = vand.u32 %v199, 4294901760
    %201 = vmatmul.mubr.f32.gmra.mrb[0].mxu0 %v200
    %v202 = vpop.f32.mrb[0].mxu0
    %v203 = vadd.f32 0.0, %v202
    %v204 = vpop.f32.mrb[0].mxu0
    %205 = vdwg.mxu0
    %206 = vmatprep.subr.mxu0 0.0
    %v207 = vand.u32 %v109, 4294901760
    %v208 = vsub.f32 %v109, %v207
    %v209 = vand.u32 %v208, 4294901760
    %v210 = vsub.f32 %v208, %v209
    %v211 = vand.u32 %v210, 4294901760
    %212 = vmatpush1.msra.mxu0 %v211
    %213 = vmatprep.subr.mxu0 0.0
    %v214 = vand.u32 %v110, 4294901760
    %v215 = vsub.f32 %v110, %v214
    %v216 = vand.u32 %v215, 4294901760
    %v217 = vsub.f32 %v215, %v216
    %v218 = vand.u32 %v217, 4294901760
    %219 = vmatpush1.msra.mxu0 %v218
    %220 = vmatprep.subr.mxu0 0.0
    %v221 = vand.u32 %v111, 4294901760
    %v222 = vsub.f32 %v111, %v221
    %v223 = vand.u32 %v222, 4294901760
    %v224 = vsub.f32 %v222, %v223
    %v225 = vand.u32 %v224, 4294901760
    %226 = vmatpush1.msra.mxu0 %v225
    %227 = vmatprep.subr.mxu0 0.0
    %228 = vmatpush1.msra.mxu0 0.0
    %229 = vmatprep.subr.mxu0 0.0
    %230 = vmatpush1.msra.mxu0 0.0
    %231 = vmatprep.subr.mxu0 0.0
    %232 = vmatpush1.msra.mxu0 0.0
    %233 = vmatprep.subr.mxu0 0.0
    %234 = vmatpush1.msra.mxu0 0.0
    %235 = vmatprep.subr.mxu0 0.0
    %236 = vmatpush1.msra.mxu0 0.0
    %237 = vmatprep.subr.mxu0 0.0
    %238 = vmatpush1.msra.mxu0 0.0
    %239 = vmatprep.subr.mxu0 0.0
    %240 = vmatpush1.msra.mxu0 0.0
    %241 = vmatprep.subr.mxu0 0.0
    %242 = vmatpush1.msra.mxu0 0.0
    %243 = vmatprep.subr.mxu0 0.0
    %244 = vmatpush1.msra.mxu0 0.0
    %245 = vmatprep.subr.mxu0 0.0
    %246 = vmatpush1.msra.mxu0 0.0
    %247 = vmatprep.subr.mxu0 0.0
    %248 = vmatpush1.msra.mxu0 0.0
    %249 = vmatprep.subr.mxu0 0.0
    %250 = vmatpush1.msra.mxu0 0.0
    %251 = vmatprep.subr.mxu0 0.0
    %252 = vmatpush1.msra.mxu0 0.0
    %253 = vmatprep.subr.mxu0 0.0
    %254 = vmatpush1.msra.mxu0 0.0
    %255 = vmatprep.subr.mxu0 0.0
    %256 = vmatpush1.msra.mxu0 0.0
    %257 = vmatprep.subr.mxu0 0.0
    %258 = vmatpush1.msra.mxu0 0.0
    %259 = vmatprep.subr.mxu0 0.0
    %260 = vmatpush1.msra.mxu0 0.0
    %261 = vmatprep.subr.mxu0 0.0
    %262 = vmatpush1.msra.mxu0 0.0
    %263 = vmatprep.subr.mxu0 0.0
    %264 = vmatpush1.msra.mxu0 0.0
    %265 = vmatprep.subr.mxu0 0.0
    %266 = vmatpush1.msra.mxu0 0.0
    %267 = vmatprep.subr.mxu0 0.0
    %268 = vmatpush1.msra.mxu0 0.0
    %269 = vmatprep.subr.mxu0 0.0
    %270 = vmatpush1.msra.mxu0 0.0
    %271 = vmatprep.subr.mxu0 0.0
    %272 = vmatpush1.msra.mxu0 0.0
    %273 = vmatprep.subr.mxu0 0.0
    %274 = vmatpush1.msra.mxu0 0.0
    %275 = vmatprep.subr.mxu0 0.0
    %276 = vmatpush1.msra.mxu0 0.0
    %277 = vmatprep.subr.mxu0 0.0
    %278 = vmatpush1.msra.mxu0 0.0
    %279 = vmatprep.subr.mxu0 0.0
    %280 = vmatpush1.msra.mxu0 0.0
    %281 = vmatprep.subr.mxu0 0.0
    %282 = vmatpush1.msra.mxu0 0.0
    %283 = vmatprep.subr.mxu0 0.0
    %284 = vmatpush1.msra.mxu0 0.0
    %285 = vmatprep.mubr.f32.mxu0 0.0
    %v286 = vand.u32 %v126, 4294901760
    %287 = vmatmul.mubr.f32.gmra.mrb[0].mxu0 %v286
    %v288 = vpop.f32.mrb[0].mxu0
    %v289 = vadd.f32 %v203, %v288
    %v290 = vpop.f32.mrb[0].mxu0
    %291 = vdwg.mxu0
    %292 = vmatprep.subr.mxu0 0.0
    %v293 = vand.u32 %v109, 4294901760
    %v294 = vsub.f32 %v109, %v293
    %295 = vmatpush1.msra.mxu0 %v294
    %296 = vmatprep.subr.mxu0 0.0
    %v297 = vand.u32 %v110, 4294901760
    %v298 = vsub.f32 %v110, %v297
    %299 = vmatpush1.msra.mxu0 %v298
    %300 = vmatprep.subr.mxu0 0.0
    %v301 = vand.u32 %v111, 4294901760
    %v302 = vsub.f32 %v111, %v301
    %303 = vmatpush1.msra.mxu0 %v302
    %304 = vmatprep.subr.mxu0 0.0
    %305 = vmatpush1.msra.mxu0 0.0
    %306 = vmatprep.subr.mxu0 0.0
    %307 = vmatpush1.msra.mxu0 0.0
    %308 = vmatprep.subr.mxu0 0.0
    %309 = vmatpush1.msra.mxu0 0.0
    %310 = vmatprep.subr.mxu0 0.0
    %311 = vmatpush1.msra.mxu0 0.0
    %312 = vmatprep.subr.mxu0 0.0
    %313 = vmatpush1.msra.mxu0 0.0
    %314 = vmatprep.subr.mxu0 0.0
    %315 = vmatpush1.msra.mxu0 0.0
    %316 = vmatprep.subr.mxu0 0.0
    %317 = vmatpush1.msra.mxu0 0.0
    %318 = vmatprep.subr.mxu0 0.0
    %319 = vmatpush1.msra.mxu0 0.0
    %320 = vmatprep.subr.mxu0 0.0
    %321 = vmatpush1.msra.mxu0 0.0
    %322 = vmatprep.subr.mxu0 0.0
    %323 = vmatpush1.msra.mxu0 0.0
    %324 = vmatprep.subr.mxu0 0.0
    %325 = vmatpush1.msra.mxu0 0.0
    %326 = vmatprep.subr.mxu0 0.0
    %327 = vmatpush1.msra.mxu0 0.0
    %328 = vmatprep.subr.mxu0 0.0
    %329 = vmatpush1.msra.mxu0 0.0
    %330 = vmatprep.subr.mxu0 0.0
    %331 = vmatpush1.msra.mxu0 0.0
    %332 = vmatprep.subr.mxu0 0.0
    %333 = vmatpush1.msra.mxu0 0.0
    %334 = vmatprep.subr.mxu0 0.0
    %335 = vmatpush1.msra.mxu0 0.0
    %336 = vmatprep.subr.mxu0 0.0
    %337 = vmatpush1.msra.mxu0 0.0
    %338 = vmatprep.subr.mxu0 0.0
    %339 = vmatpush1.msra.mxu0 0.0
    %340 = vmatprep.subr.mxu0 0.0
    %341 = vmatpush1.msra.mxu0 0.0
    %342 = vmatprep.subr.mxu0 0.0
    %343 = vmatpush1.msra.mxu0 0.0
    %344 = vmatprep.subr.mxu0 0.0
    %345 = vmatpush1.msra.mxu0 0.0
    %346 = vmatprep.subr.mxu0 0.0
    %347 = vmatpush1.msra.mxu0 0.0
    %348 = vmatprep.subr.mxu0 0.0
    %349 = vmatpush1.msra.mxu0 0.0
    %350 = vmatprep.subr.mxu0 0.0
    %351 = vmatpush1.msra.mxu0 0.0
    %352 = vmatprep.subr.mxu0 0.0
    %353 = vmatpush1.msra.mxu0 0.0
    %354 = vmatprep.subr.mxu0 0.0
    %355 = vmatpush1.msra.mxu0 0.0
    %356 = vmatprep.subr.mxu0 0.0
    %357 = vmatpush1.msra.mxu0 0.0
    %358 = vmatprep.subr.mxu0 0.0
    %359 = vmatpush1.msra.mxu0 0.0
    %360 = vmatprep.subr.mxu0 0.0
    %361 = vmatpush1.msra.mxu0 0.0
    %362 = vmatprep.mubr.f32.mxu0 0.0
    %v363 = vand.u32 %v126, 4294901760
    %v364 = vsub.f32 %v126, %v363
    %365 = vmatmul.mubr.f32.gmra.mrb[0].mxu0 %v364
    %v366 = vpop.f32.mrb[0].mxu0
    %v367 = vadd.f32 %v289, %v366
    %v368 = vpop.f32.mrb[0].mxu0
    %369 = vdwg.mxu0
    %370 = vmatprep.subr.mxu0 0.0
    %v371 = vand.u32 %v109, 4294901760
    %372 = vmatpush1.msra.mxu0 %v371
    %373 = vmatprep.subr.mxu0 0.0
    %v374 = vand.u32 %v110, 4294901760
    %375 = vmatpush1.msra.mxu0 %v374
    %376 = vmatprep.subr.mxu0 0.0
    %v377 = vand.u32 %v111, 4294901760
    %378 = vmatpush1.msra.mxu0 %v377
    %379 = vmatprep.subr.mxu0 0.0
    %380 = vmatpush1.msra.mxu0 0.0
    %381 = vmatprep.subr.mxu0 0.0
    %382 = vmatpush1.msra.mxu0 0.0
    %383 = vmatprep.subr.mxu0 0.0
    %384 = vmatpush1.msra.mxu0 0.0
    %385 = vmatprep.subr.mxu0 0.0
    %386 = vmatpush1.msra.mxu0 0.0
    %387 = vmatprep.subr.mxu0 0.0
    %388 = vmatpush1.msra.mxu0 0.0
    %389 = vmatprep.subr.mxu0 0.0
    %390 = vmatpush1.msra.mxu0 0.0
    %391 = vmatprep.subr.mxu0 0.0
    %392 = vmatpush1.msra.mxu0 0.0
    %393 = vmatprep.subr.mxu0 0.0
    %394 = vmatpush1.msra.mxu0 0.0
    %395 = vmatprep.subr.mxu0 0.0
    %396 = vmatpush1.msra.mxu0 0.0
    %397 = vmatprep.subr.mxu0 0.0
    %398 = vmatpush1.msra.mxu0 0.0
    %399 = vmatprep.subr.mxu0 0.0
    %400 = vmatpush1.msra.mxu0 0.0
    %401 = vmatprep.subr.mxu0 0.0
    %402 = vmatpush1.msra.mxu0 0.0
    %403 = vmatprep.subr.mxu0 0.0
    %404 = vmatpush1.msra.mxu0 0.0
    %405 = vmatprep.subr.mxu0 0.0
    %406 = vmatpush1.msra.mxu0 0.0
    %407 = vmatprep.subr.mxu0 0.0
    %408 = vmatpush1.msra.mxu0 0.0
    %409 = vmatprep.subr.mxu0 0.0
    %410 = vmatpush1.msra.mxu0 0.0
    %411 = vmatprep.subr.mxu0 0.0
    %412 = vmatpush1.msra.mxu0 0.0
    %413 = vmatprep.subr.mxu0 0.0
    %414 = vmatpush1.msra.mxu0 0.0
    %415 = vmatprep.subr.mxu0 0.0
    %416 = vmatpush1.msra.mxu0 0.0
    %417 = vmatprep.subr.mxu0 0.0
    %418 = vmatpush1.msra.mxu0 0.0
    %419 = vmatprep.subr.mxu0 0.0
    %420 = vmatpush1.msra.mxu0 0.0
    %421 = vmatprep.subr.mxu0 0.0
    %422 = vmatpush1.msra.mxu0 0.0
    %423 = vmatprep.subr.mxu0 0.0
    %424 = vmatpush1.msra.mxu0 0.0
    %425 = vmatprep.subr.mxu0 0.0
    %426 = vmatpush1.msra.mxu0 0.0
    %427 = vmatprep.subr.mxu0 0.0
    %428 = vmatpush1.msra.mxu0 0.0
    %429 = vmatprep.subr.mxu0 0.0
    %430 = vmatpush1.msra.mxu0 0.0
    %431 = vmatprep.subr.mxu0 0.0
    %432 = vmatpush1.msra.mxu0 0.0
    %433 = vmatprep.subr.mxu0 0.0
    %434 = vmatpush1.msra.mxu0 0.0
    %435 = vmatprep.subr.mxu0 0.0
    %436 = vmatpush1.msra.mxu0 0.0
    %437 = vmatprep.mubr.f32.mxu0 0.0
    %v438 = vand.u32 %v126, 4294901760
    %v439 = vsub.f32 %v126, %v438
    %v440 = vand.u32 %v439, 4294901760
    %441 = vmatmul.mubr.f32.gmra.mrb[0].mxu0 %v440
    %v442 = vpop.f32.mrb[0].mxu0
    %v443 = vadd.f32 %v367, %v442
    %v444 = vpop.f32.mrb[0].mxu0
    %445 = vdwg.mxu0
    %446 = vmatprep.subr.mxu0 0.0
    %v447 = vand.u32 %v109, 4294901760
    %v448 = vsub.f32 %v109, %v447
    %v449 = vand.u32 %v448, 4294901760
    %450 = vmatpush1.msra.mxu0 %v449
    %451 = vmatprep.subr.mxu0 0.0
    %v452 = vand.u32 %v110, 4294901760
    %v453 = vsub.f32 %v110, %v452
    %v454 = vand.u32 %v453, 4294901760
    %455 = vmatpush1.msra.mxu0 %v454
    %456 = vmatprep.subr.mxu0 0.0
    %v457 = vand.u32 %v111, 4294901760
    %v458 = vsub.f32 %v111, %v457
    %v459 = vand.u32 %v458, 4294901760
    %460 = vmatpush1.msra.mxu0 %v459
    %461 = vmatprep.subr.mxu0 0.0
    %462 = vmatpush1.msra.mxu0 0.0
    %463 = vmatprep.subr.mxu0 0.0
    %464 = vmatpush1.msra.mxu0 0.0
    %465 = vmatprep.subr.mxu0 0.0
    %466 = vmatpush1.msra.mxu0 0.0
    %467 = vmatprep.subr.mxu0 0.0
    %468 = vmatpush1.msra.mxu0 0.0
    %469 = vmatprep.subr.mxu0 0.0
    %470 = vmatpush1.msra.mxu0 0.0
    %471 = vmatprep.subr.mxu0 0.0
    %472 = vmatpush1.msra.mxu0 0.0
    %473 = vmatprep.subr.mxu0 0.0
    %474 = vmatpush1.msra.mxu0 0.0
    %475 = vmatprep.subr.mxu0 0.0
    %476 = vmatpush1.msra.mxu0 0.0
    %477 = vmatprep.subr.mxu0 0.0
    %478 = vmatpush1.msra.mxu0 0.0
    %479 = vmatprep.subr.mxu0 0.0
    %480 = vmatpush1.msra.mxu0 0.0
    %481 = vmatprep.subr.mxu0 0.0
    %482 = vmatpush1.msra.mxu0 0.0
    %483 = vmatprep.subr.mxu0 0.0
    %484 = vmatpush1.msra.mxu0 0.0
    %485 = vmatprep.subr.mxu0 0.0
    %486 = vmatpush1.msra.mxu0 0.0
    %487 = vmatprep.subr.mxu0 0.0
    %488 = vmatpush1.msra.mxu0 0.0
    %489 = vmatprep.subr.mxu0 0.0
    %490 = vmatpush1.msra.mxu0 0.0
    %491 = vmatprep.subr.mxu0 0.0
    %492 = vmatpush1.msra.mxu0 0.0
    %493 = vmatprep.subr.mxu0 0.0
    %494 = vmatpush1.msra.mxu0 0.0
    %495 = vmatprep.subr.mxu0 0.0
    %496 = vmatpush1.msra.mxu0 0.0
    %497 = vmatprep.subr.mxu0 0.0
    %498 = vmatpush1.msra.mxu0 0.0
    %499 = vmatprep.subr.mxu0 0.0
    %500 = vmatpush1.msra.mxu0 0.0
    %501 = vmatprep.subr.mxu0 0.0
    %502 = vmatpush1.msra.mxu0 0.0
    %503 = vmatprep.subr.mxu0 0.0
    %504 = vmatpush1.msra.mxu0 0.0
    %505 = vmatprep.subr.mxu0 0.0
    %506 = vmatpush1.msra.mxu0 0.0
    %507 = vmatprep.subr.mxu0 0.0
    %508 = vmatpush1.msra.mxu0 0.0
    %509 = vmatprep.subr.mxu0 0.0
    %510 = vmatpush1.msra.mxu0 0.0
    %511 = vmatprep.subr.mxu0 0.0
    %512 = vmatpush1.msra.mxu0 0.0
    %513 = vmatprep.subr.mxu0 0.0
    %514 = vmatpush1.msra.mxu0 0.0
    %515 = vmatprep.subr.mxu0 0.0
    %516 = vmatpush1.msra.mxu0 0.0
    %517 = vmatprep.subr.mxu0 0.0
    %518 = vmatpush1.msra.mxu0 0.0
    %519 = vmatprep.mubr.f32.mxu0 0.0
    %v520 = vand.u32 %v126, 4294901760
    %521 = vmatmul.mubr.f32.gmra.mrb[0].mxu0 %v520
    %v522 = vpop.f32.mrb[0].mxu0
    %v523 = vadd.f32 %v443, %v522
    %v524 = vpop.f32.mrb[0].mxu0
    %525 = vdwg.mxu0
    %526 = vmatprep.subr.mxu0 0.0
    %v527 = vand.u32 %v109, 4294901760
    %528 = vmatpush1.msra.mxu0 %v527
    %529 = vmatprep.subr.mxu0 0.0
    %v530 = vand.u32 %v110, 4294901760
    %531 = vmatpush1.msra.mxu0 %v530
    %532 = vmatprep.subr.mxu0 0.0
    %v533 = vand.u32 %v111, 4294901760
    %534 = vmatpush1.msra.mxu0 %v533
    %535 = vmatprep.subr.mxu0 0.0
    %536 = vmatpush1.msra.mxu0 0.0
    %537 = vmatprep.subr.mxu0 0.0
    %538 = vmatpush1.msra.mxu0 0.0
    %539 = vmatprep.subr.mxu0 0.0
    %540 = vmatpush1.msra.mxu0 0.0
    %541 = vmatprep.subr.mxu0 0.0
    %542 = vmatpush1.msra.mxu0 0.0
    %543 = vmatprep.subr.mxu0 0.0
    %544 = vmatpush1.msra.mxu0 0.0
    %545 = vmatprep.subr.mxu0 0.0
    %546 = vmatpush1.msra.mxu0 0.0
    %547 = vmatprep.subr.mxu0 0.0
    %548 = vmatpush1.msra.mxu0 0.0
    %549 = vmatprep.subr.mxu0 0.0
    %550 = vmatpush1.msra.mxu0 0.0
    %551 = vmatprep.subr.mxu0 0.0
    %552 = vmatpush1.msra.mxu0 0.0
    %553 = vmatprep.subr.mxu0 0.0
    %554 = vmatpush1.msra.mxu0 0.0
    %555 = vmatprep.subr.mxu0 0.0
    %556 = vmatpush1.msra.mxu0 0.0
    %557 = vmatprep.subr.mxu0 0.0
    %558 = vmatpush1.msra.mxu0 0.0
    %559 = vmatprep.subr.mxu0 0.0
    %560 = vmatpush1.msra.mxu0 0.0
    %561 = vmatprep.subr.mxu0 0.0
    %562 = vmatpush1.msra.mxu0 0.0
    %563 = vmatprep.subr.mxu0 0.0
    %564 = vmatpush1.msra.mxu0 0.0
    %565 = vmatprep.subr.mxu0 0.0
    %566 = vmatpush1.msra.mxu0 0.0
    %567 = vmatprep.subr.mxu0 0.0
    %568 = vmatpush1.msra.mxu0 0.0
    %569 = vmatprep.subr.mxu0 0.0
    %570 = vmatpush1.msra.mxu0 0.0
    %571 = vmatprep.subr.mxu0 0.0
    %572 = vmatpush1.msra.mxu0 0.0
    %573 = vmatprep.subr.mxu0 0.0
    %574 = vmatpush1.msra.mxu0 0.0
    %575 = vmatprep.subr.mxu0 0.0
    %576 = vmatpush1.msra.mxu0 0.0
    %577 = vmatprep.subr.mxu0 0.0
    %578 = vmatpush1.msra.mxu0 0.0
    %579 = vmatprep.subr.mxu0 0.0
    %580 = vmatpush1.msra.mxu0 0.0
    %581 = vmatprep.subr.mxu0 0.0
    %582 = vmatpush1.msra.mxu0 0.0
    %583 = vmatprep.subr.mxu0 0.0
    %584 = vmatpush1.msra.mxu0 0.0
    %585 = vmatprep.subr.mxu0 0.0
    %586 = vmatpush1.msra.mxu0 0.0
    %587 = vmatprep.subr.mxu0 0.0
    %588 = vmatpush1.msra.mxu0 0.0
    %589 = vmatprep.subr.mxu0 0.0
    %590 = vmatpush1.msra.mxu0 0.0
    %591 = vmatprep.subr.mxu0 0.0
    %592 = vmatpush1.msra.mxu0 0.0
    %593 = vmatprep.mubr.f32.mxu0 0.0
    %v594 = vand.u32 %v126, 4294901760
    %595 = vmatmul.mubr.f32.gmra.mrb[0].mxu0 %v594
    %v596 = vpop.f32.mrb[0].mxu0
    %v597 = vadd.f32 %v523, %v596
    %v598 = vpop.f32.mrb[0].mxu0
    %599 = vdwg.mxu0
    %v600 = vadd.f32 %v123, %v597
    %601 = vst [vmem:[#allocation9] sm:$0xff] %v600
    // Predicated region
    $region34: #{tpu_custom_call.1} parent=1 // pred_check
      _
    $region35: #{tpu_custom_call.1} parent=1 // pred_check_branch
      %603 = sbr.rel (0) target = $region37
    $region36: #{tpu_custom_call.1} parent=1 // pred_region
      %s605 = ssub.s32 128, 128
      %606 = vsyncadd [#allocation6], %s605
      %s608 = sshll.u32 [#allocation9], 4
      %s609 = int_to_ptr.vmem [resolvable:$true] %s608
      %611 = dma.vmem_to_hbm [thread:$0]  %s609, 128, %s5, [#allocation6]
    $region37: #{tpu_custom_call.1} parent=1 // pred_fallthru
      _
    // Predicated region
    $region38: #{tpu_custom_call.1} parent=1 // pred_check
      _
    $region39: #{tpu_custom_call.1} parent=1 // pred_check_branch
      %613 = sbr.rel (0) target = $region41
    $region40: #{tpu_custom_call.1} parent=1 // pred_region
      %614 = dma.done [#allocation6], 128
    $region41: #{tpu_custom_call.1} parent=1 // pred_fallthru
      _
    %615 = vsyncpa [#allocation5], 1
    %616 = vsyncpa [#allocation8], 1
    %617 = vsyncpa [#allocation6], 1

</llo_original>
